<compile_context>
chip_gen: v7x
topology: tpu7x:2x2x1
jax: 0.10.0
libtpu: 0.0.40
codegen_flags: <defaults>
</compile_context>

<pallas_src>
import functools

import jax
import jax.numpy as jnp
from jax.experimental import pallas as pl
from jax.experimental.pallas import tpu as pltpu


@functools.partial(jax.jit, static_argnames=("tile_n", "compute_dtype"))
def het_ord_acl_forward(x, params, *, tile_n=2048, compute_dtype=jnp.float32):
    """x: [N, d] float32.  params: wg1..wg4 / ws1..ws4 ([in, out]),
    bg*/bs* ([1, out]), tmp_bi ([K-2]).  Returns [N, K] float32 probabilities."""
    n, d = x.shape
    M = params["wg1"].shape[1]
    K = params["tmp_bi"].shape[0] + 2
    Kp = max(8, ((K + 7) // 8) * 8)          # pad K to native 8-sublane granularity
    M2 = 2 * M                               # fused g+s hidden width
    f32 = jnp.float32

    # ---- tiny O(K) coefficients: the two recurrences in closed form ---------
    #   bi   = [0, cumsum(exp(tmp_bi))]      (length K-1)
    #   B[k] = sum_{j<k} bi[j]               (length K)
    bi = jnp.concatenate([jnp.zeros((1,), f32),
                          jnp.cumsum(jnp.exp(params["tmp_bi"].astype(f32)))])
    Bvec = jnp.concatenate([jnp.zeros((1,), f32), jnp.cumsum(bi)])          # [K]

    # ---- packed resident weight slab: [2M, 4*cw] ----------------------------
    # One 128-lane-aligned column block per layer (W1 | W2 | W3 | W4), weights
    # transposed to [dout, din] and fused across the g/s branches
    # (block-diagonal for layers 2-3).
    cw = ((max(d, M2) + 127) // 128) * 128
    wslab = jnp.zeros((M2, 4 * cw), f32)
    wslab = wslab.at[:, 0:d].set(
        jnp.concatenate([params["wg1"].T, params["ws1"].T], axis=0))        # [2M, d]

    def blockdiag(a, b):
        z = jnp.zeros((M2, M2), f32)
        return z.at[:M, :M].set(a).at[M:, M:].set(b)

    wslab = wslab.at[:, cw:cw + M2].set(blockdiag(params["wg2"].T, params["ws2"].T))
    wslab = wslab.at[:, 2 * cw:2 * cw + M2].set(blockdiag(params["wg3"].T, params["ws3"].T))
    w4 = jnp.zeros((2, M2), f32)
    w4 = w4.at[0, :M].set(params["wg4"][:, 0]).at[1, M:].set(params["ws4"][:, 0])
    wslab = wslab.at[0:2, 3 * cw:3 * cw + M2].set(w4)
    wslab = wslab.astype(compute_dtype)

    # ---- packed resident bias / coefficient slab: [max(2M, Kp), 7] ----------
    #   col 0..2 : fused biases of layers 1..3   (rows 0..2M-1)
    #   col 3    : layer-4 biases (bg4, bs4)     (rows 0..1)
    #   col 4    : B[k]                          (rows 0..K-1)
    #   col 5    : k                             (rows 0..K-1)
    #   col 6    : logit bias (0 valid rows, -1e30 for pad rows K..Kp-1)
    R = max(M2, Kp)
    bc = jnp.zeros((R, 7), f32)
    bc = bc.at[:M2, 0].set(jnp.concatenate([params["bg1"].reshape(-1),
                                            params["bs1"].reshape(-1)]))
    bc = bc.at[:M2, 1].set(jnp.concatenate([params["bg2"].reshape(-1),
                                            params["bs2"].reshape(-1)]))
    bc = bc.at[:M2, 2].set(jnp.concatenate([params["bg3"].reshape(-1),
                                            params["bs3"].reshape(-1)]))
    bc = bc.at[0, 3].set(params["bg4"].reshape(()))
    bc = bc.at[1, 3].set(params["bs4"].reshape(()))
    bc = bc.at[:K, 4].set(Bvec)
    bc = bc.at[:K, 5].set(jnp.arange(K, dtype=f32))
    bc = bc.at[K:Kp, 6].set(-1e30)

    # ---- batch tiling: multiple of 128 lanes; >= 2 grid steps when N allows -
    nb = pl.cdiv(n, 128)
    tb = max(1, min(int(tile_n) // 128, nb))
    if nb >= 2:
        tb = min(tb, max(1, nb // 2))        # v7x megacore: never a 1-step grid
    grid_n = pl.cdiv(nb, tb)
    tile = tb * 128
    n_pad = grid_n * tile

    # Batch-in-lanes: single fused transpose + cast + pad pass over x.
    x_t = jnp.pad(x.T.astype(compute_dtype), ((0, 0), (0, n_pad - n)))      # [d, n_pad]

    def kernel(x_ref, w_ref, bc_ref, o_ref):
        x_blk = x_ref[...]                                   # [d, tile]
        w1 = w_ref[:, 0:d]                                   # [2M, d]
        w2 = w_ref[:, cw:cw + M2]                            # [2M, 2M]
        w3 = w_ref[:, 2 * cw:2 * cw + M2]                    # [2M, 2M]
        w4_ = w_ref[0:2, 3 * cw:3 * cw + M2]                 # [2, 2M]
        b1 = bc_ref[0:M2, 0:1]
        b2 = bc_ref[0:M2, 1:2]
        b3 = bc_ref[0:M2, 2:3]
        b4 = bc_ref[0:2, 3:4]
        Bk = bc_ref[0:Kp, 4:5]
        ck = bc_ref[0:Kp, 5:6]
        mb = bc_ref[0:Kp, 6:7]

        def dense(w, h, b):
            # weights-as-LHS matmul, f32 accumulation, f32 bias add.
            return jnp.dot(w, h.astype(w.dtype),
                           preferred_element_type=jnp.float32) + b

        h = jax.nn.sigmoid(dense(w1, x_blk, b1))             # [2M, tile] f32
        h = jax.nn.sigmoid(dense(w2, h, b2))
        h = jax.nn.sigmoid(dense(w3, h, b3))
        gs = dense(w4_, h, b4)                               # [2, tile]  f32

        g_t = gs[0:1, :]                                     # [1, tile]
        s_t = 1.0 + jnp.exp(gs[1:2, :] * 0.1)                # [1, tile]

        # tmp2^T[k, n] = (B[k] - k*g[n]) / s[n]; softmax over K (sublane axis).
        logits = mb - (Bk - ck * g_t) / s_t                  # [Kp, tile]
        logits = logits - jnp.max(logits, axis=0, keepdims=True)
        e = jnp.exp(logits)
        o_ref[...] = (e / jnp.sum(e, axis=0, keepdims=True)).astype(o_ref.dtype)

    out_t = pl.pallas_call(
        kernel,
        out_shape=jax.ShapeDtypeStruct((Kp, n_pad), jnp.float32),
        grid=(grid_n,),
        in_specs=[
            pl.BlockSpec((d, tile), lambda i: (0, i)),       # x^T, batch-tiled
            pl.BlockSpec((M2, 4 * cw), lambda i: (0, 0)),    # weight slab (resident)
            pl.BlockSpec((R, 7), lambda i: (0, 0)),          # bias/coef slab (resident)
        ],
        out_specs=pl.BlockSpec((Kp, tile), lambda i: (0, i)),
        compiler_params=pltpu.CompilerParams(
            dimension_semantics=("parallel",)),
    )(x_t, wslab, bc)

    # Kernel emits [Kp, N_pad] (lane-dense); restore the module's [N, K].
    return out_t[:K, :n].T


def init_params(key, d, M, K, std=0.1):
    ks = jax.random.split(key, 17)
    p = {}
    i = 0
    layer_dims = [(d, M), (M, M), (M, M), (M, 1)]
    for br in ("g", "s"):
        for li, (din, dout) in enumerate(layer_dims, start=1):
            p[f"w{br}{li}"] = std * jax.random.normal(ks[i], (din, dout), jnp.float32)
            p[f"b{br}{li}"] = std * jax.random.normal(ks[i + 1], (1, dout), jnp.float32)
            i += 2
    # The module inits tmp_bi to zeros; use small random values so the
    # bi / cumsum path is actually exercised by the check.
    p["tmp_bi"] = std * jax.random.normal(ks[16], (K - 2,), jnp.float32)
    return p


def het_ord_acl_reference(x, p):
    """Pure-JAX mirror of the PyTorch forward (loops written as cumsums)."""
    def mlp(x, br):
        h = jax.nn.sigmoid(x @ p[f"w{br}1"] + p[f"b{br}1"])
        h = jax.nn.sigmoid(h @ p[f"w{br}2"] + p[f"b{br}2"])
        h = jax.nn.sigmoid(h @ p[f"w{br}3"] + p[f"b{br}3"])
        return h @ p[f"w{br}4"] + p[f"b{br}4"]

    g = mlp(x, "g")                                   # [N, 1]
    s = 1.0 + jnp.exp(mlp(x, "s") / 10.0)             # [N, 1]
    bi = jnp.concatenate([jnp.zeros((1,), jnp.float32),
                          jnp.cumsum(jnp.exp(p["tmp_bi"]))])        # [K-1]
    tmp1 = (bi[None, :] - g) / s                      # [N, K-1]
    tmp2 = jnp.concatenate([jnp.zeros((x.shape[0], 1), jnp.float32),
                            jnp.cumsum(tmp1, axis=1)], axis=1)       # [N, K]
    return jax.nn.softmax(-tmp2, axis=1)


if __name__ == "__main__":
    d, M, K = 32, 32, 5
    N = 300                      # not a multiple of 128: exercises padding + multi-step grid
    key = jax.random.PRNGKey(0)
    kx, kp = jax.random.split(key)
    x = jax.random.normal(kx, (N, d), jnp.float32)
    params = init_params(kp, d, M, K)

    ref = het_ord_acl_reference(x, params)

    # f32 path, small tile -> 3 grid steps (checks index maps, padding, K-pad masking).
    out_f32 = jax.block_until_ready(
        het_ord_acl_forward(x, params, tile_n=128, compute_dtype=jnp.float32))
    assert out_f32.shape == (N, K)
    assert bool(jnp.allclose(out_f32, ref, atol=5e-3, rtol=5e-3)), "f32 kernel mismatch"

    # bf16 weights/x (v6e/v7x recommendation), default-size tile.
    out_bf16 = jax.block_until_ready(
        het_ord_acl_forward(x, params, tile_n=2048, compute_dtype=jnp.bfloat16))
    assert out_bf16.shape == (N, K)
    assert bool(jnp.allclose(out_bf16, ref, atol=3e-2, rtol=3e-2)), "bf16 kernel mismatch"

    print("KERNEL_OK")
</pallas_src>

<mosaic_0001>
module attributes {stable_mosaic.version = 11 : i64} {
  func.func @kernel(%arg0: i32, %arg1: memref<32x128xf32, #tpu.memory_space<vmem>>, %arg2: memref<64x512xf32, #tpu.memory_space<vmem>>, %arg3: memref<64x7xf32, #tpu.memory_space<vmem>>, %arg4: memref<8x128xf32, #tpu.memory_space<vmem>>) attributes {dimension_semantics = [#tpu.dimension_semantics<parallel>], iteration_bounds = array<i64: 3>, scalar_prefetch = 0 : i64, scratch_operands = 0 : i64, tpu.core_type = #tpu.core_type<tc>, window_params = [{transform_indices = @transform_0, window_bounds = array<i64: 32, 128>}, {pipeline_mode = #tpu.pipeline_mode<synchronous>, transform_indices = @transform_1, window_bounds = array<i64: 64, 512>}, {pipeline_mode = #tpu.pipeline_mode<synchronous>, transform_indices = @transform_2, window_bounds = array<i64: 64, 7>}, {transform_indices = @transform_3, window_bounds = array<i64: 8, 128>}]} {
    %c0 = arith.constant 0 : index
    %c0_0 = arith.constant 0 : index
    %0 = vector.load %arg1[%c0, %c0_0] : memref<32x128xf32, #tpu.memory_space<vmem>>, vector<32x128xf32>
    %c0_1 = arith.constant 0 : index
    %c0_2 = arith.constant 0 : index
    %1 = vector.load %arg2[%c0_1, %c0_2] : memref<64x512xf32, #tpu.memory_space<vmem>>, vector<64x32xf32>
    %c0_3 = arith.constant 0 : index
    %c128 = arith.constant 128 : index
    %2 = vector.load %arg2[%c0_3, %c128] : memref<64x512xf32, #tpu.memory_space<vmem>>, vector<64x64xf32>
    %c0_4 = arith.constant 0 : index
    %c256 = arith.constant 256 : index
    %3 = vector.load %arg2[%c0_4, %c256] : memref<64x512xf32, #tpu.memory_space<vmem>>, vector<64x64xf32>
    %c0_5 = arith.constant 0 : index
    %c384 = arith.constant 384 : index
    %4 = vector.load %arg2[%c0_5, %c384] : memref<64x512xf32, #tpu.memory_space<vmem>>, vector<2x64xf32>
    %c0_6 = arith.constant 0 : index
    %c0_7 = arith.constant 0 : index
    %5 = vector.load %arg3[%c0_6, %c0_7] : memref<64x7xf32, #tpu.memory_space<vmem>>, vector<64x1xf32>
    %c0_8 = arith.constant 0 : index
    %c1 = arith.constant 1 : index
    %6 = vector.load %arg3[%c0_8, %c1] : memref<64x7xf32, #tpu.memory_space<vmem>>, vector<64x1xf32>
    %c0_9 = arith.constant 0 : index
    %c2 = arith.constant 2 : index
    %7 = vector.load %arg3[%c0_9, %c2] : memref<64x7xf32, #tpu.memory_space<vmem>>, vector<64x1xf32>
    %c0_10 = arith.constant 0 : index
    %c3 = arith.constant 3 : index
    %8 = vector.load %arg3[%c0_10, %c3] : memref<64x7xf32, #tpu.memory_space<vmem>>, vector<2x1xf32>
    %c0_11 = arith.constant 0 : index
    %c4 = arith.constant 4 : index
    %9 = vector.load %arg3[%c0_11, %c4] : memref<64x7xf32, #tpu.memory_space<vmem>>, vector<8x1xf32>
    %c0_12 = arith.constant 0 : index
    %c5 = arith.constant 5 : index
    %10 = vector.load %arg3[%c0_12, %c5] : memref<64x7xf32, #tpu.memory_space<vmem>>, vector<8x1xf32>
    %c0_13 = arith.constant 0 : index
    %c6 = arith.constant 6 : index
    %11 = vector.load %arg3[%c0_13, %c6] : memref<64x7xf32, #tpu.memory_space<vmem>>, vector<8x1xf32>
    %cst = arith.constant dense<0.000000e+00> : vector<64x128xf32>
    %12 = tpu.matmul %1, %0, %cst {dimension_numbers = #tpu.dot_dimension_numbers<[1], [0], [0], [1], [0, 0, 1, 1], [], []>} : vector<64x32xf32>, vector<32x128xf32>, vector<64x128xf32> -> vector<64x128xf32>
    %13 = vector.broadcast %5 : vector<64x1xf32> to vector<64x128xf32>
    %14 = arith.addf %12, %13 : vector<64x128xf32>
    %15 = arith.negf %14 : vector<64x128xf32>
    %16 = math.exp %15 : vector<64x128xf32>
    %cst_14 = arith.constant 1.000000e+00 : f32
    %17 = vector.broadcast %cst_14 : f32 to vector<64x128xf32>
    %18 = arith.addf %17, %16 : vector<64x128xf32>
    %19 = arith.divf %17, %18 : vector<64x128xf32>
    %cst_15 = arith.constant dense<0.000000e+00> : vector<64x128xf32>
    %20 = tpu.matmul %2, %19, %cst_15 {dimension_numbers = #tpu.dot_dimension_numbers<[1], [0], [0], [1], [0, 0, 1, 1], [], []>} : vector<64x64xf32>, vector<64x128xf32>, vector<64x128xf32> -> vector<64x128xf32>
    %21 = vector.broadcast %6 : vector<64x1xf32> to vector<64x128xf32>
    %22 = arith.addf %20, %21 : vector<64x128xf32>
    %23 = arith.negf %22 : vector<64x128xf32>
    %24 = math.exp %23 : vector<64x128xf32>
    %cst_16 = arith.constant 1.000000e+00 : f32
    %25 = vector.broadcast %cst_16 : f32 to vector<64x128xf32>
    %26 = arith.addf %25, %24 : vector<64x128xf32>
    %27 = arith.divf %25, %26 : vector<64x128xf32>
    %cst_17 = arith.constant dense<0.000000e+00> : vector<64x128xf32>
    %28 = tpu.matmul %3, %27, %cst_17 {dimension_numbers = #tpu.dot_dimension_numbers<[1], [0], [0], [1], [0, 0, 1, 1], [], []>} : vector<64x64xf32>, vector<64x128xf32>, vector<64x128xf32> -> vector<64x128xf32>
    %29 = vector.broadcast %7 : vector<64x1xf32> to vector<64x128xf32>
    %30 = arith.addf %28, %29 : vector<64x128xf32>
    %31 = arith.negf %30 : vector<64x128xf32>
    %32 = math.exp %31 : vector<64x128xf32>
    %cst_18 = arith.constant 1.000000e+00 : f32
    %33 = vector.broadcast %cst_18 : f32 to vector<64x128xf32>
    %34 = arith.addf %33, %32 : vector<64x128xf32>
    %35 = arith.divf %33, %34 : vector<64x128xf32>
    %cst_19 = arith.constant dense<0.000000e+00> : vector<2x128xf32>
    %36 = tpu.matmul %4, %35, %cst_19 {dimension_numbers = #tpu.dot_dimension_numbers<[1], [0], [0], [1], [0, 0, 1, 1], [], []>} : vector<2x64xf32>, vector<64x128xf32>, vector<2x128xf32> -> vector<2x128xf32>
    %37 = vector.broadcast %8 : vector<2x1xf32> to vector<2x128xf32>
    %38 = arith.addf %36, %37 : vector<2x128xf32>
    %39 = vector.extract_strided_slice %38 {offsets = [0, 0], sizes = [1, 128], strides = [1, 1]} : vector<2x128xf32> to vector<1x128xf32>
    %40 = vector.extract_strided_slice %38 {offsets = [1, 0], sizes = [1, 128], strides = [1, 1]} : vector<2x128xf32> to vector<1x128xf32>
    %cst_20 = arith.constant 1.000000e-01 : f32
    %41 = vector.broadcast %cst_20 : f32 to vector<1x128xf32>
    %42 = arith.mulf %40, %41 : vector<1x128xf32>
    %43 = math.exp %42 : vector<1x128xf32>
    %cst_21 = arith.constant 1.000000e+00 : f32
    %44 = vector.broadcast %cst_21 : f32 to vector<1x128xf32>
    %45 = arith.addf %44, %43 : vector<1x128xf32>
    %46 = vector.broadcast %10 : vector<8x1xf32> to vector<8x128xf32>
    %47 = vector.broadcast %39 : vector<1x128xf32> to vector<8x128xf32>
    %48 = arith.mulf %46, %47 : vector<8x128xf32>
    %49 = vector.broadcast %9 : vector<8x1xf32> to vector<8x128xf32>
    %50 = arith.subf %49, %48 : vector<8x128xf32>
    %51 = vector.broadcast %45 : vector<1x128xf32> to vector<8x128xf32>
    %52 = arith.divf %50, %51 : vector<8x128xf32>
    %53 = vector.broadcast %11 : vector<8x1xf32> to vector<8x128xf32>
    %54 = arith.subf %53, %52 : vector<8x128xf32>
    %cst_22 = arith.constant dense<0xFF800000> : vector<128xf32>
    %55 = vector.multi_reduction <maximumf>, %54, %cst_22 [0] : vector<8x128xf32> to vector<128xf32>
    %56 = vector.shape_cast %55 : vector<128xf32> to vector<1x128xf32>
    %57 = vector.broadcast %56 : vector<1x128xf32> to vector<8x128xf32>
    %58 = arith.subf %54, %57 : vector<8x128xf32>
    %59 = math.exp %58 : vector<8x128xf32>
    %cst_23 = arith.constant dense<0.000000e+00> : vector<128xf32>
    %60 = vector.multi_reduction <add>, %59, %cst_23 [0] : vector<8x128xf32> to vector<128xf32>
    %61 = vector.shape_cast %60 : vector<128xf32> to vector<1x128xf32>
    %62 = vector.broadcast %61 : vector<1x128xf32> to vector<8x128xf32>
    %63 = arith.divf %59, %62 : vector<8x128xf32>
    %c0_24 = arith.constant 0 : index
    %c0_25 = arith.constant 0 : index
    %64 = vector.load %arg4[%c0_24, %c0_25] : memref<8x128xf32, #tpu.memory_space<vmem>>, vector<8x128xf32>
    tpu.vector_store %arg4[%c0_24, %c0_25], %63 {strides = array<i32>} : memref<8x128xf32, #tpu.memory_space<vmem>>, vector<8x128xf32>,
    return
  }
  func.func @transform_0(%arg0: i32) -> (i32, i32) {
    %c0_i32 = arith.constant 0 : i32
    %c0_i32_0 = arith.constant 0 : i32
    return %c0_i32, %arg0 : i32, i32
  }
  func.func @transform_1(%arg0: i32) -> (i32, i32) {
    %c0_i32 = arith.constant 0 : i32
    %c0_i32_0 = arith.constant 0 : i32
    %c0_i32_1 = arith.constant 0 : i32
    return %c0_i32, %c0_i32_0 : i32, i32
  }
  func.func @transform_2(%arg0: i32) -> (i32, i32) {
    %c0_i32 = arith.constant 0 : i32
    %c0_i32_0 = arith.constant 0 : i32
    %c0_i32_1 = arith.constant 0 : i32
    return %c0_i32, %c0_i32_0 : i32, i32
  }
  func.func @transform_3(%arg0: i32) -> (i32, i32) {
    %c0_i32 = arith.constant 0 : i32
    %c0_i32_0 = arith.constant 0 : i32
    return %c0_i32, %arg0 : i32, i32
  }
}

</mosaic_0001>

<llo_original>
// kernel: het_ord_acl_forward.1
$region0: #{het_ord_acl_forward.1}
  #allocation0 [shape = 'u32[]', space=smem, size = 0x4, offset = 0x4, fixed_abs, tag = 'smem constant byte address 0x4 - core index']
  #allocation1 [shape = 'u32[144,128]{1,0:T(1,128)}', space=vmem, size = 0x12000, scoped, tag = 'internal scratch']
  %s0 = inlined_call_operand.vmem [shape: f32[32,384], index: 0, kind: input, shape index: {}]
  %s1 = inlined_call_operand.vmem [shape: f32[64,512], index: 1, kind: input, shape index: {}]
  %s2 = inlined_call_operand.vmem [shape: f32[64,7], index: 2, kind: input, shape index: {}]
  %s3 = inlined_call_operand.vmem [shape: f32[8,384], index: 3, kind: output, shape index: {}]
  %s4 = sld [smem:[#allocation0]]
  $region83: #{het_ord_acl_forward.1} parent=0
    _
  %s6 = ssub.s32 1, %s4
  %s7 = scalar_select 0, %s6, %s4
  $region1: #{het_ord_acl_forward.1} parent=0
    #allocation2 [shape = 'u8[32768]{0}', space=vmem, size = 0x8000, scoped, tag = 'input window, operand 0']
    loop: start=0, step=1, limit=5
    $region2: #{het_ord_acl_forward.1} parent=1 // loop_pre_header
      _
    $region3: #{het_ord_acl_forward.1} parent=1 // loop_header
      %s9 = sphi 0, %s13
      %p10 = scmp.ge.s32.totalorder %s9, 5
      %s19 = sphi 0, %s21
      %s22 = sphi 0, %s19
      %s23 = sphi 0, %s22
      %s39 = sphi 0, %s23
      %s43 = sphi 0, %s43
      %s45 = sphi 0, %s43
      %s46 = sphi 0, %s45
      %s60 = sphi 0, %s46
      %s64 = sphi 0, %s64
      %s66 = sphi 0, %s64
      %s67 = sphi 0, %s66
      %s81 = sphi 0, %s67
      %s87 = sphi 0, %s89
      %s90 = sphi 0, %s87
      %s91 = sphi 0, %s90
      %s107 = sphi 0, %s91
    $region4: #{het_ord_acl_forward.1} parent=1 // loop_header_branch
      %12 = sbr.rel (%p10) target = $region8
    $region5: #{het_ord_acl_forward.1} parent=1 // loop_body
      %s14 = ssub.s32 %s9, 1
      %s15 = ssub.s32 %s9, 2
      %s16 = sadd.s32 %s9, 1
      %s17 = ssub.s32 %s9, %s16
      %p18 = scmp.eq.s32.totalorder %s17, 0
      %s20 = sadd.s32 %s19, 1
      %s21 = scalar_select %p18, %s19, %s20
      %p24 = pneg %p18
      %p25 = scmp.eq.s32.totalorder %s9, 2
      %p26 = por %p24, %p25
      %p27 = scmp.ne.s32.totalorder %s19, %s22
      %p28 = scmp.eq.s32.totalorder %s9, 0
      %p29 = por %p27, %p28
      %p30 = scmp.ne.s32.totalorder %s19, %s22
      %p31 = scmp.eq.s32.totalorder %s14, 2
      %p32 = por %p30, %p31
      %p33 = scmp.ne.s32.totalorder %s22, %s23
      %p34 = scmp.eq.s32.totalorder %s14, 0
      %p35 = por %p33, %p34
      %p36 = scmp.ne.s32.totalorder %s22, %s23
      %p37 = scmp.eq.s32.totalorder %s15, 2
      %p38 = por %p36, %p37
      %p40 = scmp.ne.s32.totalorder %s23, %s39
      %p41 = scmp.eq.s32.totalorder %s15, 0
      %p42 = por %p40, %p41
      %s44 = sadd.s32 %s43, 1
      %p47 = scmp.eq.s32.totalorder %s9, 2
      %p48 = scmp.ne.s32.totalorder %s43, %s45
      %p49 = scmp.eq.s32.totalorder %s9, 0
      %p50 = por %p48, %p49
      %p51 = scmp.ne.s32.totalorder %s43, %s45
      %p52 = scmp.eq.s32.totalorder %s14, 2
      %p53 = por %p51, %p52
      %p54 = scmp.ne.s32.totalorder %s45, %s46
      %p55 = scmp.eq.s32.totalorder %s14, 0
      %p56 = por %p54, %p55
      %p57 = scmp.ne.s32.totalorder %s45, %s46
      %p58 = scmp.eq.s32.totalorder %s15, 2
      %p59 = por %p57, %p58
      %p61 = scmp.ne.s32.totalorder %s46, %s60
      %p62 = scmp.eq.s32.totalorder %s15, 0
      %p63 = por %p61, %p62
      %s65 = sadd.s32 %s64, 1
      %p68 = scmp.eq.s32.totalorder %s9, 2
      %p69 = scmp.ne.s32.totalorder %s64, %s66
      %p70 = scmp.eq.s32.totalorder %s9, 0
      %p71 = por %p69, %p70
      %p72 = scmp.ne.s32.totalorder %s64, %s66
      %p73 = scmp.eq.s32.totalorder %s14, 2
      %p74 = por %p72, %p73
      %p75 = scmp.ne.s32.totalorder %s66, %s67
      %p76 = scmp.eq.s32.totalorder %s14, 0
      %p77 = por %p75, %p76
      %p78 = scmp.ne.s32.totalorder %s66, %s67
      %p79 = scmp.eq.s32.totalorder %s15, 2
      %p80 = por %p78, %p79
      %p82 = scmp.ne.s32.totalorder %s67, %s81
      %p83 = scmp.eq.s32.totalorder %s15, 0
      %p84 = por %p82, %p83
      %s85 = ssub.s32 %s9, %s16
      %p86 = scmp.eq.s32.totalorder %s85, 0
      %s88 = sadd.s32 %s87, 1
      %s89 = scalar_select %p86, %s87, %s88
      %p92 = pneg %p86
      %p93 = scmp.eq.s32.totalorder %s9, 2
      %p94 = por %p92, %p93
      %p95 = scmp.ne.s32.totalorder %s87, %s90
      %p96 = scmp.eq.s32.totalorder %s9, 0
      %p97 = por %p95, %p96
      %p98 = scmp.ne.s32.totalorder %s87, %s90
      %p99 = scmp.eq.s32.totalorder %s14, 2
      %p100 = por %p98, %p99
      %p101 = scmp.ne.s32.totalorder %s90, %s91
      %p102 = scmp.eq.s32.totalorder %s14, 0
      %p103 = por %p101, %p102
      %p104 = scmp.ne.s32.totalorder %s90, %s91
      %p105 = scmp.eq.s32.totalorder %s15, 2
      %p106 = por %p104, %p105
      %p108 = scmp.ne.s32.totalorder %s91, %s107
      %p109 = scmp.eq.s32.totalorder %s15, 0
      %p110 = por %p108, %p109
      %p111 = scmp.le.s32.totalorder 1, %s9
      %p112 = scmp.lt.s32.totalorder %s9, 4
      %p113 = pnand %p111, %p112
      %p114 = pneg %p113
      // Predicated region
      $region9: #{het_ord_acl_forward.1} parent=5 // pred_check
        _
      $region10: #{het_ord_acl_forward.1} parent=5 // pred_check_branch
        %116 = sbr.rel (%p113) target = $region12
      $region11: #{het_ord_acl_forward.1} parent=5 // pred_region
        %s117 = ssub.s32 %s9, 1
        // Predicated region
        $region13: #{het_ord_acl_forward.1} parent=11 // pred_check
          %p118 = pneg %p56
        $region14: #{het_ord_acl_forward.1} parent=11 // pred_check_branch
          %120 = sbr.rel (%p118) target = $region16
        $region15: #{het_ord_acl_forward.1} parent=11 // pred_region
          _
        $region16: #{het_ord_acl_forward.1} parent=11 // pred_fallthru
          _
        // Predicated region
        $region17: #{het_ord_acl_forward.1} parent=11 // pred_check
          %p121 = pneg %p77
        $region18: #{het_ord_acl_forward.1} parent=11 // pred_check_branch
          %123 = sbr.rel (%p121) target = $region20
        $region19: #{het_ord_acl_forward.1} parent=11 // pred_region
          _
        $region20: #{het_ord_acl_forward.1} parent=11 // pred_fallthru
          _
      $region12: #{het_ord_acl_forward.1} parent=5 // pred_fallthru
        _
      %p124 = scmp.lt.s32.totalorder %s9, 3
      // Predicated region
      $region21: #{het_ord_acl_forward.1} parent=5 // pred_check
        %p125 = pneg %p124
      $region22: #{het_ord_acl_forward.1} parent=5 // pred_check_branch
        %127 = sbr.rel (%p125) target = $region24
      $region23: #{het_ord_acl_forward.1} parent=5 // pred_region
        // Predicated region
        $region25: #{het_ord_acl_forward.1} parent=23 // pred_check
          %p128 = pneg %p29
        $region26: #{het_ord_acl_forward.1} parent=23 // pred_check_branch
          %130 = sbr.rel (%p128) target = $region28
        $region27: #{het_ord_acl_forward.1} parent=23 // pred_region
          %s131 = sand.u32 %s19, 1
          %s132 = sand.u32 %s19, 1
          %s133 = smul.addr %s132, 32
          %s134 = scalar_lea.vmem [#allocation2], %s133
          %s135 = smul.addr %s9, 8
          %s136 = scalar_lea.vmem %s0, %s135
          // Predicated region
          $region29: #{het_ord_acl_forward.1} parent=27 // pred_check
            _
          $region30: #{het_ord_acl_forward.1} parent=27 // pred_check_branch
            %138 = sbr.rel (0) target = $region32
          $region31: #{het_ord_acl_forward.1} parent=27 // pred_region
            // Predicated region
            $region33: #{het_ord_acl_forward.1} parent=31 // pred_check
              _
            $region34: #{het_ord_acl_forward.1} parent=31 // pred_check_branch
              %140 = sbr.rel (0) target = $region36
            $region35: #{het_ord_acl_forward.1} parent=31 // pred_region
              // Predicated region
              $region48: #{het_ord_acl_forward.1} parent=35 // pred_check
                _
              $region49: #{het_ord_acl_forward.1} parent=35 // pred_check_branch
                %161 = sbr.rel (0) target = $region51
              $region50: #{het_ord_acl_forward.1} parent=35 // pred_region
                loop: start=0, step=1, limit=1
                $region52: #{het_ord_acl_forward.1} parent=50 // loop_pre_header
                  _
                $region53: #{het_ord_acl_forward.1} parent=50 // loop_header
                  %s163 = sphi 0, %s167
                  %p164 = scmp.ge.s32.totalorder %s163, 1
                  %s168 = sphi %s136, %s136
                  %s169 = sphi %s134, %s134
                $region54: #{het_ord_acl_forward.1} parent=50 // loop_header_branch
                  %166 = sbr.rel (%p164) target = $region58
                $region55: #{het_ord_acl_forward.1} parent=50 // loop_body
                  %v170 = vld [vmem:[%s168] sm:$0xff]
                  %171 = vst [vmem:[%s169] sm:$0xff] %v170
                  %v172 = vld [vmem:[%s168 + $0x18] sm:$0xff]
                  %173 = vst [vmem:[%s169 + $0x8] sm:$0xff] %v172
                  %v174 = vld [vmem:[%s168 + $0x30] sm:$0xff]
                  %175 = vst [vmem:[%s169 + $0x10] sm:$0xff] %v174
                  %v176 = vld [vmem:[%s168 + $0x48] sm:$0xff]
                  %177 = vst [vmem:[%s169 + $0x18] sm:$0xff] %v176
                $region56: #{het_ord_acl_forward.1} parent=50 // loop_footer
                  %s167 = sadd.s32 1, %s163
                $region57: #{het_ord_acl_forward.1} parent=50 // loop_footer_branch
                  %162 = sbr.rel target = $region53
                $region58: #{het_ord_acl_forward.1} parent=50 // loop_exit
                  _
              $region51: #{het_ord_acl_forward.1} parent=35 // pred_fallthru
                _
              // Predicated region
              $region59: #{het_ord_acl_forward.1} parent=35 // pred_check
                _
              $region60: #{het_ord_acl_forward.1} parent=35 // pred_check_branch
                %179 = sbr.rel target = $region62
              $region61: #{het_ord_acl_forward.1} parent=35 // pred_region
                _
              $region62: #{het_ord_acl_forward.1} parent=35 // pred_fallthru
                _
            $region36: #{het_ord_acl_forward.1} parent=31 // pred_fallthru
              _
            // Predicated region
            $region37: #{het_ord_acl_forward.1} parent=31 // pred_check
              _
            $region38: #{het_ord_acl_forward.1} parent=31 // pred_check_branch
              %142 = sbr.rel target = $region40
            $region39: #{het_ord_acl_forward.1} parent=31 // pred_region
              loop: start=0, step=1, limit=1
              $region41: #{het_ord_acl_forward.1} parent=39 // loop_pre_header
                _
              $region42: #{het_ord_acl_forward.1} parent=39 // loop_header
                %s145 = sphi 0, %s149
                %p146 = scmp.ge.s32.totalorder %s145, 1
                %s150 = sphi %s136, %s136
                %s151 = sphi %s134, %s134
              $region43: #{het_ord_acl_forward.1} parent=39 // loop_header_branch
                %148 = sbr.rel (%p146) target = $region47
              $region44: #{het_ord_acl_forward.1} parent=39 // loop_body
                %v152 = vld [vmem:[%s150] sm:$0xff]
                %153 = vst [vmem:[%s151] sm:$0xff] %v152
                %v154 = vld [vmem:[%s150 + $0x18] sm:$0xff]
                %155 = vst [vmem:[%s151 + $0x8] sm:$0xff] %v154
                %v156 = vld [vmem:[%s150 + $0x30] sm:$0xff]
                %157 = vst [vmem:[%s151 + $0x10] sm:$0xff] %v156
                %v158 = vld [vmem:[%s150 + $0x48] sm:$0xff]
                %159 = vst [vmem:[%s151 + $0x18] sm:$0xff] %v158
              $region45: #{het_ord_acl_forward.1} parent=39 // loop_footer
                %s149 = sadd.s32 1, %s145
              $region46: #{het_ord_acl_forward.1} parent=39 // loop_footer_branch
                %144 = sbr.rel target = $region42
              $region47: #{het_ord_acl_forward.1} parent=39 // loop_exit
                _
            $region40: #{het_ord_acl_forward.1} parent=31 // pred_fallthru
              _
          $region32: #{het_ord_acl_forward.1} parent=27 // pred_fallthru
            _
          %180 = vnop
        $region28: #{het_ord_acl_forward.1} parent=23 // pred_fallthru
          _
      $region24: #{het_ord_acl_forward.1} parent=5 // pred_fallthru
        _
      %p181 = scmp.le.s32.totalorder 1, %s9
      %p182 = scmp.lt.s32.totalorder %s9, 4
      %p183 = pnand %p181, %p182
      %p184 = pneg %p183
      // Predicated region
      $region63: #{het_ord_acl_forward.1} parent=5 // pred_check
        _
      $region64: #{het_ord_acl_forward.1} parent=5 // pred_check_branch
        %186 = sbr.rel (%p183) target = $region66
      $region65: #{het_ord_acl_forward.1} parent=5 // pred_region
        %s187 = ssub.s32 %s9, 1
        %s188 = sand.u32 %s22, 1
        %s189 = sand.u32 %s22, 1
        %s190 = smul.addr %s189, 32
        %s191 = scalar_lea.vmem [#allocation2], %s190
        // Predicated region
        $region67: #{het_ord_acl_forward.1} parent=65 // pred_check
          %p192 = pneg %p35
        $region68: #{het_ord_acl_forward.1} parent=65 // pred_check_branch
          %194 = sbr.rel (%p192) target = $region70
        $region69: #{het_ord_acl_forward.1} parent=65 // pred_region
          _
        $region70: #{het_ord_acl_forward.1} parent=65 // pred_fallthru
          _
        %s195 = sand.u32 %s22, 1
        %s196 = sand.u32 %s22, 1
        %s197 = smul.addr %s196, 32
        %s198 = scalar_lea.vmem [#allocation2], %s197
        %p199 = pneg %p35
        %p200 = pneg %p32
        %p201 = pneg %p56
        %p202 = pneg %p53
        %p203 = pneg %p77
        %p204 = pneg %p74
        %p205 = pneg %p103
        %p206 = pneg %p100
        %p207 = scmp.lt.s32.totalorder %s14, 2
        %s208 = scalar_select %p207, %s14, 2
        %s209 = smul.addr %s208, 8
        %s210 = scalar_lea.vmem %s3, %s209
        %p211 = scmp.lt.s32.totalorder %s14, 2
        %s212 = scalar_select %p211, %s14, 2
        %s213 = smul.addr %s212, 8
        %s214 = scalar_lea.vmem %s3, %s213
        %v215 = vld [vmem:[%s191] sm:$0xff]
        %v216 = vld [vmem:[%s191 + $0x8] sm:$0xff]
        %v217 = vld [vmem:[%s191 + $0x10] sm:$0xff]
        %v218 = vld [vmem:[%s191 + $0x18] sm:$0xff]
        %v219 = vld [vmem:[%s1] sm:$0xff]
        %v220 = vld [vmem:[%s1 + $0x20] sm:$0xff]
        %v221 = vld [vmem:[%s1 + $0x40] sm:$0xff]
        %v222 = vld [vmem:[%s1 + $0x60] sm:$0xff]
        %v223 = vld [vmem:[%s1 + $0x80] sm:$0xff]
        %v224 = vld [vmem:[%s1 + $0xa0] sm:$0xff]
        %v225 = vld [vmem:[%s1 + $0xc0] sm:$0xff]
        %v226 = vld [vmem:[%s1 + $0xe0] sm:$0xff]
        %v227 = vld [vmem:[%s1 + $0x8] sm:$0xff]
        %v228 = vld [vmem:[%s1 + $0x28] sm:$0xff]
        %v229 = vld [vmem:[%s1 + $0x48] sm:$0xff]
        %v230 = vld [vmem:[%s1 + $0x68] sm:$0xff]
        %v231 = vld [vmem:[%s1 + $0x88] sm:$0xff]
        %v232 = vld [vmem:[%s1 + $0xa8] sm:$0xff]
        %v233 = vld [vmem:[%s1 + $0xc8] sm:$0xff]
        %v234 = vld [vmem:[%s1 + $0xe8] sm:$0xff]
        %v235 = vld [vmem:[%s1 + $0x10] sm:$0xff]
        %v236 = vld [vmem:[%s1 + $0x30] sm:$0xff]
        %v237 = vld [vmem:[%s1 + $0x50] sm:$0xff]
        %v238 = vld [vmem:[%s1 + $0x70] sm:$0xff]
        %v239 = vld [vmem:[%s1 + $0x90] sm:$0xff]
        %v240 = vld [vmem:[%s1 + $0xb0] sm:$0xff]
        %v241 = vld [vmem:[%s1 + $0xd0] sm:$0xff]
        %v242 = vld [vmem:[%s1 + $0xf0] sm:$0xff]
        %v243 = vld [vmem:[%s1 + $0x18] sm:$0x3]
        %v244 = vld [vmem:[%s2] sm:$0xff]
        %v245 = vld [vmem:[%s2 + $0x8] sm:$0xff]
        %v246 = vld [vmem:[%s2 + $0x10] sm:$0xff]
        %v247 = vld [vmem:[%s2 + $0x18] sm:$0xff]
        %v248 = vld [vmem:[%s2 + $0x20] sm:$0xff]
        %v249 = vld [vmem:[%s2 + $0x28] sm:$0xff]
        %v250 = vld [vmem:[%s2 + $0x30] sm:$0xff]
        %v251 = vld [vmem:[%s2 + $0x38] sm:$0xff]
        %v252 = vld [vmem:[%s2] sm:$0x3]
        %254 = vset.pattern.permute.xlu0 0
        %255 = vperm.xlu0 %254, %v244
        %v256 = vpop.permute.xlu0 %255
        %259 = vset.pattern.permute.xlu0 0
        %260 = vperm.xlu0 %259, %v245
        %v261 = vpop.permute.xlu0 %260
        %264 = vset.pattern.permute.xlu0 0
        %265 = vperm.xlu0 %264, %v246
        %v266 = vpop.permute.xlu0 %265
        %269 = vset.pattern.permute.xlu0 0
        %270 = vperm.xlu0 %269, %v247
        %v271 = vpop.permute.xlu0 %270
        %274 = vset.pattern.permute.xlu0 0
        %275 = vperm.xlu0 %274, %v248
        %v276 = vpop.permute.xlu0 %275
        %279 = vset.pattern.permute.xlu0 0
        %280 = vperm.xlu0 %279, %v249
        %v281 = vpop.permute.xlu0 %280
        %284 = vset.pattern.permute.xlu0 0
        %285 = vperm.xlu0 %284, %v250
        %v286 = vpop.permute.xlu0 %285
        %289 = vset.pattern.permute.xlu0 0
        %290 = vperm.xlu0 %289, %v251
        %v291 = vpop.permute.xlu0 %290
        %vm293 = vcmask 261120
        %v295 = vsel %vm293, %v219, 0
        %v298 = vsel %vm293, %v220, 0
        %v301 = vsel %vm293, %v221, 0
        %v304 = vsel %vm293, %v222, 0
        %v307 = vsel %vm293, %v223, 0
        %v310 = vsel %vm293, %v224, 0
        %v313 = vsel %vm293, %v225, 0
        %v316 = vsel %vm293, %v226, 0
        %318 = vmatprep.subr.mxu0 0.0
        %319 = vmatpush1.msra.mxu0 %v215
        %320 = vmatprep.subr.mxu0 0.0
        %321 = vmatpush1.msra.mxu0 %v216
        %322 = vmatprep.subr.mxu0 0.0
        %323 = vmatpush1.msra.mxu0 %v217
        %324 = vmatprep.subr.mxu0 0.0
        %325 = vmatpush1.msra.mxu0 %v218
        %326 = vmatprep.subr.mxu0 0.0
        %327 = vmatpush1.msra.mxu0 0.0
        %328 = vmatprep.subr.mxu0 0.0
        %329 = vmatpush1.msra.mxu0 0.0
        %330 = vmatprep.subr.mxu0 0.0
        %331 = vmatpush1.msra.mxu0 0.0
        %332 = vmatprep.subr.mxu0 0.0
        %333 = vmatpush1.msra.mxu0 0.0
        %334 = vmatprep.subr.mxu0 0.0
        %335 = vmatpush1.msra.mxu0 0.0
        %336 = vmatprep.subr.mxu0 0.0
        %337 = vmatpush1.msra.mxu0 0.0
        %338 = vmatprep.subr.mxu0 0.0
        %339 = vmatpush1.msra.mxu0 0.0
        %340 = vmatprep.subr.mxu0 0.0
        %341 = vmatpush1.msra.mxu0 0.0
        %342 = vmatprep.subr.mxu0 0.0
        %343 = vmatpush1.msra.mxu0 0.0
        %344 = vmatprep.subr.mxu0 0.0
        %345 = vmatpush1.msra.mxu0 0.0
        %346 = vmatprep.subr.mxu0 0.0
        %347 = vmatpush1.msra.mxu0 0.0
        %348 = vmatprep.subr.mxu0 0.0
        %349 = vmatpush1.msra.mxu0 0.0
        %350 = vmatprep.subr.mxu0 0.0
        %351 = vmatpush1.msra.mxu0 0.0
        %352 = vmatprep.subr.mxu0 0.0
        %353 = vmatpush1.msra.mxu0 0.0
        %354 = vmatprep.subr.mxu0 0.0
        %355 = vmatpush1.msra.mxu0 0.0
        %356 = vmatprep.subr.mxu0 0.0
        %357 = vmatpush1.msra.mxu0 0.0
        %358 = vmatprep.subr.mxu0 0.0
        %359 = vmatpush1.msra.mxu0 0.0
        %360 = vmatprep.subr.mxu0 0.0
        %361 = vmatpush1.msra.mxu0 0.0
        %362 = vmatprep.subr.mxu0 0.0
        %363 = vmatpush1.msra.mxu0 0.0
        %364 = vmatprep.subr.mxu0 0.0
        %365 = vmatpush1.msra.mxu0 0.0
        %366 = vmatprep.subr.mxu0 0.0
        %367 = vmatpush1.msra.mxu0 0.0
        %368 = vmatprep.subr.mxu0 0.0
        %369 = vmatpush1.msra.mxu0 0.0
        %370 = vmatprep.subr.mxu0 0.0
        %371 = vmatpush1.msra.mxu0 0.0
        %372 = vmatprep.subr.mxu0 0.0
        %373 = vmatpush1.msra.mxu0 0.0
        %374 = vmatprep.subr.mxu0 0.0
        %375 = vmatpush1.msra.mxu0 0.0
        %376 = vmatprep.subr.mxu0 0.0
        %377 = vmatpush1.msra.mxu0 0.0
        %378 = vmatprep.subr.mxu0 0.0
        %379 = vmatpush1.msra.mxu0 0.0
        %380 = vmatprep.subr.mxu0 0.0
        %381 = vmatpush1.msra.mxu0 0.0
        %382 = vmatprep.mubr.f32.mxu0 0.0
        %383 = vmatmul.mubr.f32.gmra.mrb[0].mxu0 %v295
        %v384 = vpop.f32.mrb[0].mxu0
        %v385 = vadd.f32 %v256, %v384
        %v386 = vpop.f32.mrb[0].mxu0
        %387 = vmatprep.mubr.f32.mxu0 0.0
        %388 = vmatmul.mubr.f32.gmra.mrb[0].mxu0 %v298
        %v389 = vpop.f32.mrb[0].mxu0
        %v390 = vadd.f32 %v261, %v389
        %v391 = vpop.f32.mrb[0].mxu0
        %392 = vmatprep.mubr.f32.mxu0 0.0
        %393 = vmatmul.mubr.f32.gmra.mrb[0].mxu0 %v301
        %v394 = vpop.f32.mrb[0].mxu0
        %v395 = vadd.f32 %v266, %v394
        %v396 = vpop.f32.mrb[0].mxu0
        %397 = vmatprep.mubr.f32.mxu0 0.0
        %398 = vmatmul.mubr.f32.gmra.mrb[0].mxu0 %v304
        %v399 = vpop.f32.mrb[0].mxu0
        %v400 = vadd.f32 %v271, %v399
        %v401 = vpop.f32.mrb[0].mxu0
        %402 = vmatprep.mubr.f32.mxu0 0.0
        %403 = vmatmul.mubr.f32.gmra.mrb[0].mxu0 %v307
        %v404 = vpop.f32.mrb[0].mxu0
        %v405 = vadd.f32 %v276, %v404
        %v406 = vpop.f32.mrb[0].mxu0
        %407 = vmatprep.mubr.f32.mxu0 0.0
        %408 = vmatmul.mubr.f32.gmra.mrb[0].mxu0 %v310
        %v409 = vpop.f32.mrb[0].mxu0
        %v410 = vadd.f32 %v281, %v409
        %v411 = vpop.f32.mrb[0].mxu0
        %412 = vmatprep.mubr.f32.mxu0 0.0
        %413 = vmatmul.mubr.f32.gmra.mrb[0].mxu0 %v313
        %v414 = vpop.f32.mrb[0].mxu0
        %v415 = vadd.f32 %v286, %v414
        %v416 = vpop.f32.mrb[0].mxu0
        %417 = vmatprep.mubr.f32.mxu0 0.0
        %418 = vmatmul.mubr.f32.gmra.mrb[0].mxu0 %v316
        %v419 = vpop.f32.mrb[0].mxu0
        %v420 = vadd.f32 %v291, %v419
        %v421 = vpop.f32.mrb[0].mxu0
        %422 = vdwg.mxu0
        %v423 = vxor.u32 %v385, 2147483648
        %v424 = vxor.u32 %v390, 2147483648
        %v425 = vxor.u32 %v395, 2147483648
        %v426 = vxor.u32 %v400, 2147483648
        %v427 = vxor.u32 %v405, 2147483648
        %v428 = vxor.u32 %v410, 2147483648
        %v429 = vxor.u32 %v415, 2147483648
        %v430 = vxor.u32 %v420, 2147483648
        %v431 = vmul.f32 %v423, 1.442695
        %v432 = vpow.pop %v431
        %v433 = vmul.f32 %v424, 1.442695
        %v434 = vpow.pop %v433
        %v435 = vmul.f32 %v425, 1.442695
        %v436 = vpow.pop %v435
        %v437 = vmul.f32 %v426, 1.442695
        %v438 = vpow.pop %v437
        %v439 = vmul.f32 %v427, 1.442695
        %v440 = vpow.pop %v439
        %v441 = vmul.f32 %v428, 1.442695
        %v442 = vpow.pop %v441
        %v443 = vmul.f32 %v429, 1.442695
        %v444 = vpow.pop %v443
        %v445 = vmul.f32 %v430, 1.442695
        %v446 = vpow.pop %v445
        %v447 = vadd.f32 %v432, 1.0
        %v448 = vadd.f32 %v434, 1.0
        %v449 = vadd.f32 %v436, 1.0
        %v450 = vadd.f32 %v438, 1.0
        %v451 = vadd.f32 %v440, 1.0
        %v452 = vadd.f32 %v442, 1.0
        %v453 = vadd.f32 %v444, 1.0
        %v454 = vadd.f32 %v446, 1.0
        %v455 = vrcp.pop %v447
        %v456 = vmul.f32 1.0, %v455
        %v457 = vrcp.pop %v448
        %v458 = vmul.f32 1.0, %v457
        %v459 = vrcp.pop %v449
        %v460 = vmul.f32 1.0, %v459
        %v461 = vrcp.pop %v450
        %v462 = vmul.f32 1.0, %v461
        %v463 = vrcp.pop %v451
        %v464 = vmul.f32 1.0, %v463
        %v465 = vrcp.pop %v452
        %v466 = vmul.f32 1.0, %v465
        %v467 = vrcp.pop %v453
        %v468 = vmul.f32 1.0, %v467
        %v469 = vrcp.pop %v454
        %v470 = vmul.f32 1.0, %v469
        %471 = vset.pattern.permute.xlu0 1
        %472 = vperm.xlu0 %471, %v244
        %v473 = vpop.permute.xlu0 %472
        %475 = vset.pattern.permute.xlu0 1
        %476 = vperm.xlu0 %475, %v245
        %v477 = vpop.permute.xlu0 %476
        %479 = vset.pattern.permute.xlu0 1
        %480 = vperm.xlu0 %479, %v246
        %v481 = vpop.permute.xlu0 %480
        %483 = vset.pattern.permute.xlu0 1
        %484 = vperm.xlu0 %483, %v247
        %v485 = vpop.permute.xlu0 %484
        %487 = vset.pattern.permute.xlu0 1
        %488 = vperm.xlu0 %487, %v248
        %v489 = vpop.permute.xlu0 %488
        %491 = vset.pattern.permute.xlu0 1
        %492 = vperm.xlu0 %491, %v249
        %v493 = vpop.permute.xlu0 %492
        %495 = vset.pattern.permute.xlu0 1
        %496 = vperm.xlu0 %495, %v250
        %v497 = vpop.permute.xlu0 %496
        %499 = vset.pattern.permute.xlu0 1
        %500 = vperm.xlu0 %499, %v251
        %v501 = vpop.permute.xlu0 %500
        %vm503 = vcmask 523264
        %v505 = vsel %vm503, %v227, 0
        %v508 = vsel %vm503, %v228, 0
        %v511 = vsel %vm503, %v229, 0
        %v514 = vsel %vm503, %v230, 0
        %v517 = vsel %vm503, %v231, 0
        %v520 = vsel %vm503, %v232, 0
        %v523 = vsel %vm503, %v233, 0
        %v526 = vsel %vm503, %v234, 0
        %528 = vmatprep.subr.mxu0 0.0
        %529 = vmatpush1.msra.mxu0 %v456
        %530 = vmatprep.subr.mxu0 0.0
        %531 = vmatpush1.msra.mxu0 %v458
        %532 = vmatprep.subr.mxu0 0.0
        %533 = vmatpush1.msra.mxu0 %v460
        %534 = vmatprep.subr.mxu0 0.0
        %535 = vmatpush1.msra.mxu0 %v462
        %536 = vmatprep.subr.mxu0 0.0
        %537 = vmatpush1.msra.mxu0 %v464
        %538 = vmatprep.subr.mxu0 0.0
        %539 = vmatpush1.msra.mxu0 %v466
        %540 = vmatprep.subr.mxu0 0.0
        %541 = vmatpush1.msra.mxu0 %v468
        %542 = vmatprep.subr.mxu0 0.0
        %543 = vmatpush1.msra.mxu0 %v470
        %544 = vmatprep.subr.mxu0 0.0
        %545 = vmatpush1.msra.mxu0 0.0
        %546 = vmatprep.subr.mxu0 0.0
        %547 = vmatpush1.msra.mxu0 0.0
        %548 = vmatprep.subr.mxu0 0.0
        %549 = vmatpush1.msra.mxu0 0.0
        %550 = vmatprep.subr.mxu0 0.0
        %551 = vmatpush1.msra.mxu0 0.0
        %552 = vmatprep.subr.mxu0 0.0
        %553 = vmatpush1.msra.mxu0 0.0
        %554 = vmatprep.subr.mxu0 0.0
        %555 = vmatpush1.msra.mxu0 0.0
        %556 = vmatprep.subr.mxu0 0.0
        %557 = vmatpush1.msra.mxu0 0.0
        %558 = vmatprep.subr.mxu0 0.0
        %559 = vmatpush1.msra.mxu0 0.0
        %560 = vmatprep.subr.mxu0 0.0
        %561 = vmatpush1.msra.mxu0 0.0
        %562 = vmatprep.subr.mxu0 0.0
        %563 = vmatpush1.msra.mxu0 0.0
        %564 = vmatprep.subr.mxu0 0.0
        %565 = vmatpush1.msra.mxu0 0.0
        %566 = vmatprep.subr.mxu0 0.0
        %567 = vmatpush1.msra.mxu0 0.0
        %568 = vmatprep.subr.mxu0 0.0
        %569 = vmatpush1.msra.mxu0 0.0
        %570 = vmatprep.subr.mxu0 0.0
        %571 = vmatpush1.msra.mxu0 0.0
        %572 = vmatprep.subr.mxu0 0.0
        %573 = vmatpush1.msra.mxu0 0.0
        %574 = vmatprep.subr.mxu0 0.0
        %575 = vmatpush1.msra.mxu0 0.0
        %576 = vmatprep.subr.mxu0 0.0
        %577 = vmatpush1.msra.mxu0 0.0
        %578 = vmatprep.subr.mxu0 0.0
        %579 = vmatpush1.msra.mxu0 0.0
        %580 = vmatprep.subr.mxu0 0.0
        %581 = vmatpush1.msra.mxu0 0.0
        %582 = vmatprep.subr.mxu0 0.0
        %583 = vmatpush1.msra.mxu0 0.0
        %584 = vmatprep.subr.mxu0 0.0
        %585 = vmatpush1.msra.mxu0 0.0
        %586 = vmatprep.subr.mxu0 0.0
        %587 = vmatpush1.msra.mxu0 0.0
        %588 = vmatprep.subr.mxu0 0.0
        %589 = vmatpush1.msra.mxu0 0.0
        %590 = vmatprep.subr.mxu0 0.0
        %591 = vmatpush1.msra.mxu0 0.0
        %592 = vmatprep.mubr.f32.mxu0 0.0
        %593 = vmatmul.mubr.f32.gmra.mrb[0].mxu0 %v505
        %v594 = vpop.f32.mrb[0].mxu0
        %v595 = vadd.f32 %v473, %v594
        %v596 = vpop.f32.mrb[0].mxu0
        %597 = vmatprep.mubr.f32.mxu0 0.0
        %598 = vmatmul.mubr.f32.gmra.mrb[0].mxu0 %v508
        %v599 = vpop.f32.mrb[0].mxu0
        %v600 = vadd.f32 %v477, %v599
        %v601 = vpop.f32.mrb[0].mxu0
        %602 = vmatprep.mubr.f32.mxu0 0.0
        %603 = vmatmul.mubr.f32.gmra.mrb[0].mxu0 %v511
        %v604 = vpop.f32.mrb[0].mxu0
        %v605 = vadd.f32 %v481, %v604
        %v606 = vpop.f32.mrb[0].mxu0
        %607 = vmatprep.mubr.f32.mxu0 0.0
        %608 = vmatmul.mubr.f32.gmra.mrb[0].mxu0 %v514
        %v609 = vpop.f32.mrb[0].mxu0
        %v610 = vadd.f32 %v485, %v609
        %v611 = vpop.f32.mrb[0].mxu0
        %612 = vmatprep.mubr.f32.mxu0 0.0
        %613 = vmatmul.mubr.f32.gmra.mrb[0].mxu0 %v517
        %v614 = vpop.f32.mrb[0].mxu0
        %v615 = vadd.f32 %v489, %v614
        %v616 = vpop.f32.mrb[0].mxu0
        %617 = vmatprep.mubr.f32.mxu0 0.0
        %618 = vmatmul.mubr.f32.gmra.mrb[0].mxu0 %v520
        %v619 = vpop.f32.mrb[0].mxu0
        %v620 = vadd.f32 %v493, %v619
        %v621 = vpop.f32.mrb[0].mxu0
        %622 = vmatprep.mubr.f32.mxu0 0.0
        %623 = vmatmul.mubr.f32.gmra.mrb[0].mxu0 %v523
        %v624 = vpop.f32.mrb[0].mxu0
        %v625 = vadd.f32 %v497, %v624
        %v626 = vpop.f32.mrb[0].mxu0
        %627 = vmatprep.mubr.f32.mxu0 0.0
        %628 = vmatmul.mubr.f32.gmra.mrb[0].mxu0 %v526
        %v629 = vpop.f32.mrb[0].mxu0
        %v630 = vadd.f32 %v501, %v629
        %v631 = vpop.f32.mrb[0].mxu0
        %632 = vdwg.mxu0
        %v633 = vxor.u32 %v595, 2147483648
        %v634 = vxor.u32 %v600, 2147483648
        %v635 = vxor.u32 %v605, 2147483648
        %v636 = vxor.u32 %v610, 2147483648
        %v637 = vxor.u32 %v615, 2147483648
        %v638 = vxor.u32 %v620, 2147483648
        %v639 = vxor.u32 %v625, 2147483648
        %v640 = vxor.u32 %v630, 2147483648
        %v641 = vmul.f32 %v633, 1.442695
        %v642 = vpow.pop %v641
        %v643 = vmul.f32 %v634, 1.442695
        %v644 = vpow.pop %v643
        %v645 = vmul.f32 %v635, 1.442695
        %v646 = vpow.pop %v645
        %v647 = vmul.f32 %v636, 1.442695
        %v648 = vpow.pop %v647
        %v649 = vmul.f32 %v637, 1.442695
        %v650 = vpow.pop %v649
        %v651 = vmul.f32 %v638, 1.442695
        %v652 = vpow.pop %v651
        %v653 = vmul.f32 %v639, 1.442695
        %v654 = vpow.pop %v653
        %v655 = vmul.f32 %v640, 1.442695
        %v656 = vpow.pop %v655
        %v657 = vadd.f32 %v642, 1.0
        %v658 = vadd.f32 %v644, 1.0
        %v659 = vadd.f32 %v646, 1.0
        %v660 = vadd.f32 %v648, 1.0
        %v661 = vadd.f32 %v650, 1.0
        %v662 = vadd.f32 %v652, 1.0
        %v663 = vadd.f32 %v654, 1.0
        %v664 = vadd.f32 %v656, 1.0
        %v665 = vrcp.pop %v657
        %v666 = vmul.f32 1.0, %v665
        %v667 = vrcp.pop %v658
        %v668 = vmul.f32 1.0, %v667
        %v669 = vrcp.pop %v659
        %v670 = vmul.f32 1.0, %v669
        %v671 = vrcp.pop %v660
        %v672 = vmul.f32 1.0, %v671
        %v673 = vrcp.pop %v661
        %v674 = vmul.f32 1.0, %v673
        %v675 = vrcp.pop %v662
        %v676 = vmul.f32 1.0, %v675
        %v677 = vrcp.pop %v663
        %v678 = vmul.f32 1.0, %v677
        %v679 = vrcp.pop %v664
        %v680 = vmul.f32 1.0, %v679
        %681 = vset.pattern.permute.xlu0 2
        %682 = vperm.xlu0 %681, %v244
        %v683 = vpop.permute.xlu0 %682
        %685 = vset.pattern.permute.xlu0 2
        %686 = vperm.xlu0 %685, %v245
        %v687 = vpop.permute.xlu0 %686
        %689 = vset.pattern.permute.xlu0 2
        %690 = vperm.xlu0 %689, %v246
        %v691 = vpop.permute.xlu0 %690
        %693 = vset.pattern.permute.xlu0 2
        %694 = vperm.xlu0 %693, %v247
        %v695 = vpop.permute.xlu0 %694
        %697 = vset.pattern.permute.xlu0 2
        %698 = vperm.xlu0 %697, %v248
        %v699 = vpop.permute.xlu0 %698
        %701 = vset.pattern.permute.xlu0 2
        %702 = vperm.xlu0 %701, %v249
        %v703 = vpop.permute.xlu0 %702
        %705 = vset.pattern.permute.xlu0 2
        %706 = vperm.xlu0 %705, %v250
        %v707 = vpop.permute.xlu0 %706
        %709 = vset.pattern.permute.xlu0 2
        %710 = vperm.xlu0 %709, %v251
        %v711 = vpop.permute.xlu0 %710
        %v714 = vsel %vm503, %v235, 0
        %v717 = vsel %vm503, %v236, 0
        %v720 = vsel %vm503, %v237, 0
        %v723 = vsel %vm503, %v238, 0
        %v726 = vsel %vm503, %v239, 0
        %v729 = vsel %vm503, %v240, 0
        %v732 = vsel %vm503, %v241, 0
        %v735 = vsel %vm503, %v242, 0
        %737 = vmatprep.subr.mxu0 0.0
        %738 = vmatpush1.msra.mxu0 %v666
        %739 = vmatprep.subr.mxu0 0.0
        %740 = vmatpush1.msra.mxu0 %v668
        %741 = vmatprep.subr.mxu0 0.0
        %742 = vmatpush1.msra.mxu0 %v670
        %743 = vmatprep.subr.mxu0 0.0
        %744 = vmatpush1.msra.mxu0 %v672
        %745 = vmatprep.subr.mxu0 0.0
        %746 = vmatpush1.msra.mxu0 %v674
        %747 = vmatprep.subr.mxu0 0.0
        %748 = vmatpush1.msra.mxu0 %v676
        %749 = vmatprep.subr.mxu0 0.0
        %750 = vmatpush1.msra.mxu0 %v678
        %751 = vmatprep.subr.mxu0 0.0
        %752 = vmatpush1.msra.mxu0 %v680
        %753 = vmatprep.subr.mxu0 0.0
        %754 = vmatpush1.msra.mxu0 0.0
        %755 = vmatprep.subr.mxu0 0.0
        %756 = vmatpush1.msra.mxu0 0.0
        %757 = vmatprep.subr.mxu0 0.0
        %758 = vmatpush1.msra.mxu0 0.0
        %759 = vmatprep.subr.mxu0 0.0
        %760 = vmatpush1.msra.mxu0 0.0
        %761 = vmatprep.subr.mxu0 0.0
        %762 = vmatpush1.msra.mxu0 0.0
        %763 = vmatprep.subr.mxu0 0.0
        %764 = vmatpush1.msra.mxu0 0.0
        %765 = vmatprep.subr.mxu0 0.0
        %766 = vmatpush1.msra.mxu0 0.0
        %767 = vmatprep.subr.mxu0 0.0
        %768 = vmatpush1.msra.mxu0 0.0
        %769 = vmatprep.subr.mxu0 0.0
        %770 = vmatpush1.msra.mxu0 0.0
        %771 = vmatprep.subr.mxu0 0.0
        %772 = vmatpush1.msra.mxu0 0.0
        %773 = vmatprep.subr.mxu0 0.0
        %774 = vmatpush1.msra.mxu0 0.0
        %775 = vmatprep.subr.mxu0 0.0
        %776 = vmatpush1.msra.mxu0 0.0
        %777 = vmatprep.subr.mxu0 0.0
        %778 = vmatpush1.msra.mxu0 0.0
        %779 = vmatprep.subr.mxu0 0.0
        %780 = vmatpush1.msra.mxu0 0.0
        %781 = vmatprep.subr.mxu0 0.0
        %782 = vmatpush1.msra.mxu0 0.0
        %783 = vmatprep.subr.mxu0 0.0
        %784 = vmatpush1.msra.mxu0 0.0
        %785 = vmatprep.subr.mxu0 0.0
        %786 = vmatpush1.msra.mxu0 0.0
        %787 = vmatprep.subr.mxu0 0.0
        %788 = vmatpush1.msra.mxu0 0.0
        %789 = vmatprep.subr.mxu0 0.0
        %790 = vmatpush1.msra.mxu0 0.0
        %791 = vmatprep.subr.mxu0 0.0
        %792 = vmatpush1.msra.mxu0 0.0
        %793 = vmatprep.subr.mxu0 0.0
        %794 = vmatpush1.msra.mxu0 0.0
        %795 = vmatprep.subr.mxu0 0.0
        %796 = vmatpush1.msra.mxu0 0.0
        %797 = vmatprep.subr.mxu0 0.0
        %798 = vmatpush1.msra.mxu0 0.0
        %799 = vmatprep.subr.mxu0 0.0
        %800 = vmatpush1.msra.mxu0 0.0
        %801 = vmatprep.mubr.f32.mxu0 0.0
        %802 = vmatmul.mubr.f32.gmra.mrb[0].mxu0 %v714
        %v803 = vpop.f32.mrb[0].mxu0
        %v804 = vadd.f32 %v683, %v803
        %v805 = vpop.f32.mrb[0].mxu0
        %806 = vmatprep.mubr.f32.mxu0 0.0
        %807 = vmatmul.mubr.f32.gmra.mrb[0].mxu0 %v717
        %v808 = vpop.f32.mrb[0].mxu0
        %v809 = vadd.f32 %v687, %v808
        %v810 = vpop.f32.mrb[0].mxu0
        %811 = vmatprep.mubr.f32.mxu0 0.0
        %812 = vmatmul.mubr.f32.gmra.mrb[0].mxu0 %v720
        %v813 = vpop.f32.mrb[0].mxu0
        %v814 = vadd.f32 %v691, %v813
        %v815 = vpop.f32.mrb[0].mxu0
        %816 = vmatprep.mubr.f32.mxu0 0.0
        %817 = vmatmul.mubr.f32.gmra.mrb[0].mxu0 %v723
        %v818 = vpop.f32.mrb[0].mxu0
        %v819 = vadd.f32 %v695, %v818
        %v820 = vpop.f32.mrb[0].mxu0
        %821 = vmatprep.mubr.f32.mxu0 0.0
        %822 = vmatmul.mubr.f32.gmra.mrb[0].mxu0 %v726
        %v823 = vpop.f32.mrb[0].mxu0
        %v824 = vadd.f32 %v699, %v823
        %v825 = vpop.f32.mrb[0].mxu0
        %826 = vmatprep.mubr.f32.mxu0 0.0
        %827 = vmatmul.mubr.f32.gmra.mrb[0].mxu0 %v729
        %v828 = vpop.f32.mrb[0].mxu0
        %v829 = vadd.f32 %v703, %v828
        %v830 = vpop.f32.mrb[0].mxu0
        %831 = vmatprep.mubr.f32.mxu0 0.0
        %832 = vmatmul.mubr.f32.gmra.mrb[0].mxu0 %v732
        %v833 = vpop.f32.mrb[0].mxu0
        %v834 = vadd.f32 %v707, %v833
        %v835 = vpop.f32.mrb[0].mxu0
        %836 = vmatprep.mubr.f32.mxu0 0.0
        %837 = vmatmul.mubr.f32.gmra.mrb[0].mxu0 %v735
        %v838 = vpop.f32.mrb[0].mxu0
        %v839 = vadd.f32 %v711, %v838
        %v840 = vpop.f32.mrb[0].mxu0
        %841 = vdwg.mxu0
        %v842 = vxor.u32 %v804, 2147483648
        %v843 = vxor.u32 %v809, 2147483648
        %v844 = vxor.u32 %v814, 2147483648
        %v845 = vxor.u32 %v819, 2147483648
        %v846 = vxor.u32 %v824, 2147483648
        %v847 = vxor.u32 %v829, 2147483648
        %v848 = vxor.u32 %v834, 2147483648
        %v849 = vxor.u32 %v839, 2147483648
        %v850 = vmul.f32 %v842, 1.442695
        %v851 = vpow.pop %v850
        %v852 = vmul.f32 %v843, 1.442695
        %v853 = vpow.pop %v852
        %v854 = vmul.f32 %v844, 1.442695
        %v855 = vpow.pop %v854
        %v856 = vmul.f32 %v845, 1.442695
        %v857 = vpow.pop %v856
        %v858 = vmul.f32 %v846, 1.442695
        %v859 = vpow.pop %v858
        %v860 = vmul.f32 %v847, 1.442695
        %v861 = vpow.pop %v860
        %v862 = vmul.f32 %v848, 1.442695
        %v863 = vpow.pop %v862
        %v864 = vmul.f32 %v849, 1.442695
        %v865 = vpow.pop %v864
        %v866 = vadd.f32 %v851, 1.0
        %v867 = vadd.f32 %v853, 1.0
        %v868 = vadd.f32 %v855, 1.0
        %v869 = vadd.f32 %v857, 1.0
        %v870 = vadd.f32 %v859, 1.0
        %v871 = vadd.f32 %v861, 1.0
        %v872 = vadd.f32 %v863, 1.0
        %v873 = vadd.f32 %v865, 1.0
        %v874 = vrcp.pop %v866
        %v875 = vmul.f32 1.0, %v874
        %v876 = vrcp.pop %v867
        %v877 = vmul.f32 1.0, %v876
        %v878 = vrcp.pop %v868
        %v879 = vmul.f32 1.0, %v878
        %v880 = vrcp.pop %v869
        %v881 = vmul.f32 1.0, %v880
        %v882 = vrcp.pop %v870
        %v883 = vmul.f32 1.0, %v882
        %v884 = vrcp.pop %v871
        %v885 = vmul.f32 1.0, %v884
        %v886 = vrcp.pop %v872
        %v887 = vmul.f32 1.0, %v886
        %v888 = vrcp.pop %v873
        %v889 = vmul.f32 1.0, %v888
        %891 = vset.pattern.permute.xlu0 3
        %892 = vperm.xlu0 %891, %v252
        %v893 = vpop.permute.xlu0 %892
        %v896 = vsel %vm503, %v243, 0
        %898 = vmatprep.subr.mxu0 0.0
        %899 = vmatpush1.msra.mxu0 %v875
        %900 = vmatprep.subr.mxu0 0.0
        %901 = vmatpush1.msra.mxu0 %v877
        %902 = vmatprep.subr.mxu0 0.0
        %903 = vmatpush1.msra.mxu0 %v879
        %904 = vmatprep.subr.mxu0 0.0
        %905 = vmatpush1.msra.mxu0 %v881
        %906 = vmatprep.subr.mxu0 0.0
        %907 = vmatpush1.msra.mxu0 %v883
        %908 = vmatprep.subr.mxu0 0.0
        %909 = vmatpush1.msra.mxu0 %v885
        %910 = vmatprep.subr.mxu0 0.0
        %911 = vmatpush1.msra.mxu0 %v887
        %912 = vmatprep.subr.mxu0 0.0
        %913 = vmatpush1.msra.mxu0 %v889
        %914 = vmatprep.subr.mxu0 0.0
        %915 = vmatpush1.msra.mxu0 0.0
        %916 = vmatprep.subr.mxu0 0.0
        %917 = vmatpush1.msra.mxu0 0.0
        %918 = vmatprep.subr.mxu0 0.0
        %919 = vmatpush1.msra.mxu0 0.0
        %920 = vmatprep.subr.mxu0 0.0
        %921 = vmatpush1.msra.mxu0 0.0
        %922 = vmatprep.subr.mxu0 0.0
        %923 = vmatpush1.msra.mxu0 0.0
        %924 = vmatprep.subr.mxu0 0.0
        %925 = vmatpush1.msra.mxu0 0.0
        %926 = vmatprep.subr.mxu0 0.0
        %927 = vmatpush1.msra.mxu0 0.0
        %928 = vmatprep.subr.mxu0 0.0
        %929 = vmatpush1.msra.mxu0 0.0
        %930 = vmatprep.subr.mxu0 0.0
        %931 = vmatpush1.msra.mxu0 0.0
        %932 = vmatprep.subr.mxu0 0.0
        %933 = vmatpush1.msra.mxu0 0.0
        %934 = vmatprep.subr.mxu0 0.0
        %935 = vmatpush1.msra.mxu0 0.0
        %936 = vmatprep.subr.mxu0 0.0
        %937 = vmatpush1.msra.mxu0 0.0
        %938 = vmatprep.subr.mxu0 0.0
        %939 = vmatpush1.msra.mxu0 0.0
        %940 = vmatprep.subr.mxu0 0.0
        %941 = vmatpush1.msra.mxu0 0.0
        %942 = vmatprep.subr.mxu0 0.0
        %943 = vmatpush1.msra.mxu0 0.0
        %944 = vmatprep.subr.mxu0 0.0
        %945 = vmatpush1.msra.mxu0 0.0
        %946 = vmatprep.subr.mxu0 0.0
        %947 = vmatpush1.msra.mxu0 0.0
        %948 = vmatprep.subr.mxu0 0.0
        %949 = vmatpush1.msra.mxu0 0.0
        %950 = vmatprep.subr.mxu0 0.0
        %951 = vmatpush1.msra.mxu0 0.0
        %952 = vmatprep.subr.mxu0 0.0
        %953 = vmatpush1.msra.mxu0 0.0
        %954 = vmatprep.subr.mxu0 0.0
        %955 = vmatpush1.msra.mxu0 0.0
        %956 = vmatprep.subr.mxu0 0.0
        %957 = vmatpush1.msra.mxu0 0.0
        %958 = vmatprep.subr.mxu0 0.0
        %959 = vmatpush1.msra.mxu0 0.0
        %960 = vmatprep.subr.mxu0 0.0
        %961 = vmatpush1.msra.mxu0 0.0
        %962 = vmatprep.mubr.f32.mxu0 0.0
        %963 = vmatmul.mubr.f32.gmra.mrb[0].mxu0 %v896
        %v964 = vpop.f32.mrb[0].mxu0
        %v965 = vadd.f32 %v893, %v964
        %v966 = vpop.f32.mrb[0].mxu0
        %967 = vdwg.mxu0
        %v968 = vmul.f32 %v965, 0.1
        %v969 = vmul.f32 %v968, 1.442695
        %v970 = vpow.pop %v969
        %v971 = vadd.f32 %v970, 1.0
        %972 = vset.pattern.permute.xlu0 5
        %973 = vperm.xlu0 %972, %v244
        %v974 = vpop.permute.xlu0 %973
        %v976 = vlaneseq
        %v977 = vshrl.u32 %v976, 7
        %v978 = vsub.s32 0, %v977
        %v979 = vrot.slane %v965, %v978
        %v980 = vmul.f32 %v974, %v979
        %981 = vset.pattern.permute.xlu0 4
        %982 = vperm.xlu0 %981, %v244
        %v983 = vpop.permute.xlu0 %982
        %v985 = vsub.f32 %v983, %v980
        %v986 = vlaneseq
        %v987 = vshrl.u32 %v986, 7
        %v988 = vsub.s32 1, %v987
        %v989 = vrot.slane %v971, %v988
        %v990 = vrcp.pop %v989
        %v991 = vmul.f32 %v985, %v990
        %992 = vset.pattern.permute.xlu0 6
        %993 = vperm.xlu0 %992, %v244
        %v994 = vpop.permute.xlu0 %993
        %v996 = vsub.f32 %v994, %v991
        %v997 = vrot.slane %v996, 4
        %v998 = vmax.f32 %v996, %v997
        %v999 = vrot.slane %v998, 2
        %v1000 = vmax.f32 %v998, %v999
        %v1001 = vrot.slane %v1000, 1
        %v1002 = vmax.f32 %v1000, %v1001
        %v1003 = vsub.f32 %v996, %v1002
        %v1004 = vmul.f32 %v1003, 1.442695
        %v1005 = vpow.pop %v1004
        %v1006 = vrot.slane %v1005, 4
        %v1007 = vadd.f32 %v1005, %v1006
        %v1008 = vrot.slane %v1007, 2
        %v1009 = vadd.f32 %v1007, %v1008
        %v1010 = vrot.slane %v1009, 1
        %v1011 = vadd.f32 %v1009, %v1010
        %v1012 = vrcp.pop %v1011
        %v1013 = vmul.f32 %v1005, %v1012
        %1014 = vst [vmem:[%s214] sm:$0xff] %v1013
        %p1015 = scmp.lt.s32.totalorder %s14, 2
        %s1016 = scalar_select %p1015, %s14, 2
        %s1017 = smul.addr %s1016, 8
        %s1018 = scalar_lea.vmem %s3, %s1017
        // Predicated region
        $region71: #{het_ord_acl_forward.1} parent=65 // pred_check
          %p1019 = pneg %p100
        $region72: #{het_ord_acl_forward.1} parent=65 // pred_check_branch
          %1021 = sbr.rel (%p1019) target = $region74
        $region73: #{het_ord_acl_forward.1} parent=65 // pred_region
          _
        $region74: #{het_ord_acl_forward.1} parent=65 // pred_fallthru
          _
      $region66: #{het_ord_acl_forward.1} parent=5 // pred_fallthru
        _
      %p1022 = scmp.le.s32.totalorder 2, %s9
      // Predicated region
      $region75: #{het_ord_acl_forward.1} parent=5 // pred_check
        %p1023 = pneg %p1022
      $region76: #{het_ord_acl_forward.1} parent=5 // pred_check_branch
        %1025 = sbr.rel (%p1023) target = $region78
      $region77: #{het_ord_acl_forward.1} parent=5 // pred_region
        %s1026 = ssub.s32 %s9, 2
        // Predicated region
        $region79: #{het_ord_acl_forward.1} parent=77 // pred_check
          %p1027 = pneg %p106
        $region80: #{het_ord_acl_forward.1} parent=77 // pred_check_branch
          %1029 = sbr.rel (%p1027) target = $region82
        $region81: #{het_ord_acl_forward.1} parent=77 // pred_region
          %p1030 = scmp.lt.s32.totalorder %s15, 2
          %s1031 = scalar_select %p1030, %s15, 2
          %s1032 = smul.addr %s1031, 8
          %s1033 = scalar_lea.vmem %s3, %s1032
        $region82: #{het_ord_acl_forward.1} parent=77 // pred_fallthru
          _
      $region78: #{het_ord_acl_forward.1} parent=5 // pred_fallthru
        _
    $region6: #{het_ord_acl_forward.1} parent=1 // loop_footer
      %s13 = sadd.s32 1, %s9
    $region7: #{het_ord_acl_forward.1} parent=1 // loop_footer_branch
      %8 = sbr.rel target = $region3
    $region8: #{het_ord_acl_forward.1} parent=1 // loop_exit
      _

</llo_original>
